<compile_context>
chip_gen: v7x
topology: tpu7x:2x2x1
jax: 0.10.0
libtpu: 0.0.40
codegen_flags: <defaults>
</compile_context>

<pallas_src>
import jax
import jax.numpy as jnp
from jax import lax
from jax.experimental import pallas as pl
from jax.experimental.pallas import tpu as pltpu


_TILE_SL_MAX = 2048                 # lanes per input block (multiple of 128)
_TARGET_BLOCK_BYTES = 4 << 20       # ~4 MiB input blocks (HBM-roofline sized)
_VMEM_LIMIT_BYTES = 32 << 20        # 2x double-buffered <=8 MiB blocks + out/scratch;
                                    # > v5e 16 MiB default, == v6e default, < v7x 64 MiB phys
_PALLAS_MIN_ELEMS = 64 * 1024       # below this, plain XLA wins (per-step ~0.35us overhead)


def _cdiv(a, b):
    return -(-a // b)


def _round_up(n, m):
    return ((n + m - 1) // m) * m


def _select_tiles(B, SL, itemsize, target_block_bytes):
    """Pick (tile_b, tile_sl). tile_b is a multiple of 8, tile_sl of 128 (or full SL)."""
    max_block_bytes = 2 * target_block_bytes

    # ---- lane (SL) tile ---------------------------------------------------
    if SL <= 128:
        tile_sl = SL                                  # full-extent block (always legal)
    else:
        sl_al = _round_up(SL, 128)
        tile_sl = min(sl_al, _TILE_SL_MAX)
        # Keep >= 2 programs on the 'parallel' SL axis so both v7x TensorCores
        # get work.  Harmless on 1-TC v5e/v6e (blocks stay multi-MiB).
        if _cdiv(SL, tile_sl) < 2:
            tile_sl = max(128, _round_up(_cdiv(sl_al, 2), 128))

    # ---- sublane (B) tile ---------------------------------------------------
    b_al = _round_up(B, 8)
    if b_al * tile_sl * itemsize <= max_block_bytes:
        tile_b = b_al                                 # whole batch in one block -> 1-D grid
    else:
        tile_b = max(8, (target_block_bytes // (tile_sl * itemsize)) // 8 * 8)
        tile_b = min(tile_b, b_al)
    return tile_b, tile_sl


def _batch_method_pallas(x2d, l_scalar, target_block_bytes=_TARGET_BLOCK_BYTES):
    """x2d: (B, SL) non-negative floats. Returns (1, SL) = sqrt(max over B) * l."""
    B, SL = x2d.shape
    dtype = x2d.dtype
    itemsize = jnp.dtype(dtype).itemsize

    tile_b, tile_sl = _select_tiles(B, SL, itemsize, target_block_bytes)
    num_sl = _cdiv(SL, tile_sl)
    num_b = _cdiv(B, tile_b)
    mask_rows = (B % tile_b) != 0       # ragged batch edge -> mask garbage rows to -inf
    n_chunks = tile_b // 8
    unroll = n_chunks <= 8

    # l as a (1,) SMEM scalar-prefetch value -> no recompile when l changes.
    l_arr = jnp.asarray(l_scalar, dtype=jnp.float32).reshape((1,))

    def fold(x_ref, b_tile, carry):
        # Stream the (tile_b, tile_sl) block through a (8, tile_sl) vreg-resident
        # carry, 8 rows at a time: pure VPU max, bounded vreg pressure, no
        # per-step cross-sublane reduce.
        def body(c, carry):
            off = pl.multiple_of(c * 8, 8)
            chunk = x_ref[pl.ds(off, 8), :]
            if mask_rows:
                row = (b_tile * tile_b + off
                       + lax.broadcasted_iota(jnp.int32, (8, tile_sl), 0))
                chunk = jnp.where(row < B, chunk, jnp.asarray(-jnp.inf, chunk.dtype))
            return jnp.maximum(carry, chunk)

        return lax.fori_loop(0, n_chunks, body, carry, unroll=unroll)

    def finalize(carry, l_ref, o_ref):
        # Single 8 -> 1 cross-sublane reduce, then sqrt * l in f32.
        col_max = jnp.max(carry, axis=0, keepdims=True).astype(jnp.float32)
        o_ref[...] = (jnp.sqrt(col_max) * l_ref[0]).astype(o_ref.dtype)

    if num_b == 1:
        # Common case: whole batch in one block. 1-D all-"parallel" grid,
        # no scratch, no init/finalize branches.
        def kernel(l_ref, x_ref, o_ref):
            init = jnp.full((8, tile_sl), -jnp.inf, dtype)
            carry = fold(x_ref, 0, init)
            finalize(carry, l_ref, o_ref)

        grid = (num_sl,)
        in_specs = [pl.BlockSpec((tile_b, tile_sl), lambda s, l: (0, s))]
        out_specs = pl.BlockSpec((1, tile_sl), lambda s, l: (0, s))
        scratch_shapes = []
        dim_sem = ("parallel",)
    else:
        # Large batch: SL parallel, B as trailing reduction axis with a resident
        # (8, tile_sl) accumulator in the input dtype.
        def kernel(l_ref, x_ref, o_ref, acc_ref):
            b = pl.program_id(1)

            @pl.when(b == 0)
            def _():
                acc_ref[...] = jnp.full_like(acc_ref, -jnp.inf)

            carry = fold(x_ref, b, acc_ref[...])
            acc_ref[...] = carry

            @pl.when(b == pl.num_programs(1) - 1)
            def _():
                finalize(carry, l_ref, o_ref)

        grid = (num_sl, num_b)
        in_specs = [pl.BlockSpec((tile_b, tile_sl), lambda s, b, l: (b, s))]
        out_specs = pl.BlockSpec((1, tile_sl), lambda s, b, l: (0, s))
        scratch_shapes = [pltpu.VMEM((8, tile_sl), dtype)]
        dim_sem = ("parallel", "arbitrary")

    out2d = pl.pallas_call(
        kernel,
        out_shape=jax.ShapeDtypeStruct((1, SL), dtype),
        grid_spec=pltpu.PrefetchScalarGridSpec(
            num_scalar_prefetch=1,
            grid=grid,
            in_specs=in_specs,
            out_specs=out_specs,
            scratch_shapes=scratch_shapes,
        ),
        compiler_params=pltpu.CompilerParams(
            dimension_semantics=dim_sem,
            vmem_limit_bytes=_VMEM_LIMIT_BYTES,
        ),
    )(l_arr, x2d)

    return out2d


def batch_method_forward(x, running_denominator, l, training=True,
                         force_pallas=False,
                         target_block_bytes=_TARGET_BLOCK_BYTES):
    """JAX equivalent of BatchMethod.forward.

    x: (B, SL, 1) NON-NEGATIVE float array (sqrt/max reorder assumes x >= 0,
       matching the module's usage as a denominator statistic).
    running_denominator: (1, SL, 1) buffer.
    Returns (output, new_running_denominator).
    """
    if not training:
        # Eval mode: no compute, just return the buffer.
        return running_denominator, running_denominator

    assert x.ndim == 3 and x.shape[2] == 1
    B, SL, _ = x.shape
    x2d = x.reshape(B, SL)  # squeeze trailing singleton (layout glue only)

    if not force_pallas and B * SL < _PALLAS_MIN_ELEMS:
        # Tiny-shape fast path: launch overhead dominates; let XLA fuse it.
        batch_ret = jnp.max(jnp.sqrt(x), axis=0, keepdims=True) * l
        return batch_ret, batch_ret

    out2d = _batch_method_pallas(x2d, l, target_block_bytes=target_block_bytes)
    batch_ret = out2d.reshape(1, SL, 1)
    # running_denominator is updated to batch_ret (torch does it under no_grad)
    return batch_ret, batch_ret


def reference_forward(x, l):
    return jnp.max(jnp.sqrt(x), axis=0, keepdims=True) * l


if __name__ == "__main__":
    key = jax.random.PRNGKey(0)
    l = 2.0  # the 'l' hyperparameter from __init__ kwargs

    k0, k1, k2 = jax.random.split(key, 3)

    # ---- 1) small module-like shape (sl=16, batch=4): collapsed 1-D grid ----
    B, SL = 4, 16
    x = jax.random.uniform(k0, (B, SL, 1), jnp.float32, 0.0, 4.0)
    rd = jnp.ones((1, SL, 1), jnp.float32)
    out, rd = batch_method_forward(x, rd, l, training=True, force_pallas=True)
    out = jax.block_until_ready(out)
    ref = reference_forward(x, l)
    assert out.shape == (1, SL, 1)
    assert jnp.allclose(out, ref, atol=1e-6, rtol=1e-6), "mismatch (small)"

    # Eval-mode forward just returns the stored buffer.
    out_eval, _ = batch_method_forward(x, rd, l, training=False)
    out_eval = jax.block_until_ready(out_eval)
    assert jnp.allclose(out_eval, out, atol=0, rtol=0)

    # ---- 2) unaligned shape: ragged SL + ragged B edge, 2 SL programs, 1-D grid
    B2, SL2 = 20, 200
    x2 = jax.random.uniform(k1, (B2, SL2, 1), jnp.float32, 0.0, 9.0)
    rd2 = jnp.ones((1, SL2, 1), jnp.float32)
    out2, _ = batch_method_forward(x2, rd2, l, training=True, force_pallas=True)
    out2 = jax.block_until_ready(out2)
    assert out2.shape == (1, SL2, 1)
    assert jnp.allclose(out2, reference_forward(x2, l), atol=1e-6, rtol=1e-6), \
        "mismatch (unaligned)"

    # ---- 3) force the 2-D B-reduction grid (tiny block budget) at small shapes
    B3, SL3 = 300, 200
    x3 = jax.random.uniform(k2, (B3, SL3, 1), jnp.float32, 0.0, 9.0)
    rd3 = jnp.ones((1, SL3, 1), jnp.float32)
    out3, _ = batch_method_forward(x3, rd3, l, training=True, force_pallas=True,
                                   target_block_bytes=64 * 1024)
    out3 = jax.block_until_ready(out3)
    assert out3.shape == (1, SL3, 1)
    assert jnp.allclose(out3, reference_forward(x3, l), atol=1e-6, rtol=1e-6), \
        "mismatch (B-reduction grid)"

    print("KERNEL_OK")
</pallas_src>

<mosaic_0001>
module attributes {stable_mosaic.version = 11 : i64} {
  func.func @kernel(%arg0: i32, %arg1: memref<1xf32, #tpu.memory_space<smem>>, %arg2: memref<8x16xf32, #tpu.memory_space<vmem>>, %arg3: memref<1x16xf32, #tpu.memory_space<vmem>>) attributes {dimension_semantics = [#tpu.dimension_semantics<parallel>], iteration_bounds = array<i64: 1>, scalar_prefetch = 1 : i64, scratch_operands = 0 : i64, tpu.core_type = #tpu.core_type<tc>, window_params = [{transform_indices = @transform_0, window_bounds = array<i64: 8, 16>}, {transform_indices = @transform_1, window_bounds = array<i64: 1, 16>}]} {
    %cst = arith.constant 0xFF800000 : f32
    %0 = vector.broadcast %cst : f32 to vector<8x16xf32>
    %c0_i32 = arith.constant 0 : i32
    %c8_i32 = arith.constant 8 : i32
    %1 = arith.muli %c0_i32, %c8_i32 : i32
    %2 = tpu.assume_multiple %1, 8 : i32
    %3 = arith.index_cast %2 : i32 to index
    %c0 = arith.constant 0 : index
    %4 = vector.load %arg2[%3, %c0] : memref<8x16xf32, #tpu.memory_space<vmem>>, vector<8x16xf32>
    %c0_i32_0 = arith.constant 0 : i32
    %5 = arith.addi %c0_i32_0, %2 : i32
    %6 = tpu.iota {dimensions = array<i32: 0>} : vector<8x16xi32>
    %7 = vector.broadcast %5 : i32 to vector<8x16xi32>
    %8 = arith.addi %7, %6 : vector<8x16xi32>
    %c4_i32 = arith.constant 4 : i32
    %9 = vector.broadcast %c4_i32 : i32 to vector<8x16xi32>
    %10 = arith.cmpi slt, %8, %9 : vector<8x16xi32>
    %cst_1 = arith.constant 0xFF800000 : f32
    %11 = vector.broadcast %cst_1 : f32 to vector<8x16xf32>
    %12 = arith.select %10, %4, %11 : vector<8x16xi1>, vector<8x16xf32>
    %13 = arith.maximumf %0, %12 : vector<8x16xf32>
    %c1_i32 = arith.constant 1 : i32
    %cst_2 = arith.constant dense<0xFF800000> : vector<16xf32>
    %14 = vector.multi_reduction <maximumf>, %13, %cst_2 [0] : vector<8x16xf32> to vector<16xf32>
    %15 = vector.shape_cast %14 : vector<16xf32> to vector<1x16xf32>
    %16 = math.sqrt %15 : vector<1x16xf32>
    %c0_3 = arith.constant 0 : index
    %17 = memref.load %arg1[%c0_3] : memref<1xf32, #tpu.memory_space<smem>>
    %18 = vector.broadcast %17 : f32 to vector<1x16xf32>
    %19 = arith.mulf %16, %18 : vector<1x16xf32>
    %c0_4 = arith.constant 0 : index
    %c0_5 = arith.constant 0 : index
    %20 = vector.load %arg3[%c0_4, %c0_5] : memref<1x16xf32, #tpu.memory_space<vmem>>, vector<1x16xf32>
    tpu.vector_store %arg3[%c0_4, %c0_5], %19 {strides = array<i32>} : memref<1x16xf32, #tpu.memory_space<vmem>>, vector<1x16xf32>,
    return
  }
  func.func @transform_0(%arg0: i32, %arg1: memref<1xf32, #tpu.memory_space<smem>>) -> (i32, i32) {
    %c0_i32 = arith.constant 0 : i32
    %c0_i32_0 = arith.constant 0 : i32
    return %c0_i32, %arg0 : i32, i32
  }
  func.func @transform_1(%arg0: i32, %arg1: memref<1xf32, #tpu.memory_space<smem>>) -> (i32, i32) {
    %c0_i32 = arith.constant 0 : i32
    %c0_i32_0 = arith.constant 0 : i32
    return %c0_i32, %arg0 : i32, i32
  }
}

</mosaic_0001>

<llo_original>
// kernel: tpu_custom_call.1
$region0: #{tpu_custom_call.1}
  #allocation0 [shape = 'u32[]', space=smem, size = 0x4, offset = 0x4, fixed_abs, tag = 'smem constant byte address 0x4 - core index']
  #allocation1 [shape = 'u32[144,128]{1,0:T(1,128)}', space=vmem, size = 0x12000, scoped, tag = 'internal scratch']
  #allocation2 [shape = 's32[1]{0}', space=sflag, size = 0x4, scoped, tag = 'scoped memory for tpu_custom_call.1']
  #allocation3 [shape = 'f32[1]{0:T(128)S(6)}', space=smem, size = 0x200, scoped, tag = 'prefetched SMEM operand 0']
  %s0 = inlined_call_operand.<no memory space> [shape: f32[1], index: 0, kind: input, shape index: {}]
  %s1 = inlined_call_operand.hbm [shape: f32[4,16], index: 1, kind: input, shape index: {}]
  %s2 = inlined_call_operand.hbm [shape: f32[1,16], index: 2, kind: output, shape index: {}]
  %s3 = sld [smem:[#allocation0]]
  $region18: #{tpu_custom_call.1} parent=0
    _
  %s5 = ssub.s32 1, %s3
  %s6 = scalar_select 0, %s5, %s3
  %7 = sst [smem:[#allocation3]] %s0
  $region1: #{tpu_custom_call.1} parent=0
    #allocation4 [shape = 'u8[4096]{0}', space=vmem, size = 0x1000, scoped, tag = 'input window, operand 1, single buffered']
    #allocation5 [shape = 's32[1]{0}', space=sflag, size = 0x4, scoped, tag = 'scoped memory for tpu_custom_call.1']
    #allocation6 [shape = 's32[1]{0}', space=sflag, size = 0x4, scoped, tag = 'scoped memory for tpu_custom_call.1']
    #allocation7 [shape = 'u8[512]{0}', space=vmem, size = 0x400, scoped, tag = 'output window, operand 0, single buffered']
    %8 = vsyncpa [#allocation5], 0
    %9 = vsyncpa [#allocation6], 0
    // Predicated region
    $region2: #{tpu_custom_call.1} parent=1 // pred_check
      _
    $region3: #{tpu_custom_call.1} parent=1 // pred_check_branch
      %11 = sbr.rel (0) target = $region5
    $region4: #{tpu_custom_call.1} parent=1 // pred_region
      %s13 = ssub.s32 128, 64
      %14 = vsyncadd [#allocation5], %s13
      %s15 = sshll.u32 [#allocation4], 4
      %s16 = int_to_ptr.vmem [resolvable:$true] %s15
      %21 = dma.hbm_to_vmem [thread:$0]  %s1, 64, %s16, [#allocation5], 64, 64, 4
    $region5: #{tpu_custom_call.1} parent=1 // pred_fallthru
      _
    // Predicated region
    $region6: #{tpu_custom_call.1} parent=1 // pred_check
      _
    $region7: #{tpu_custom_call.1} parent=1 // pred_check_branch
      %23 = sbr.rel (0) target = $region9
    $region8: #{tpu_custom_call.1} parent=1 // pred_region
      %24 = dma.done [#allocation5], 128
    $region9: #{tpu_custom_call.1} parent=1 // pred_fallthru
      _
    %v25 = vld [vmem:[#allocation4] sm:$0xff]
    %v26 = vlaneseq
    %v27 = vshrl.u32 %v26, 7
    %v28 = vstv 0
    %v29 = vadd.s32 %v28, %v27
    %vm30 = vcmp.lt.s32.totalorder %v29, 4
    %v31 = vsel %vm30, %v25, -inf
    %vm32 = vcmask 130048
    %v33 = vsel %vm32, %v31, -inf
    %v34 = vrot.slane %v33, 4
    %v35 = vmax.f32 %v33, %v34
    %v36 = vrot.slane %v35, 2
    %v37 = vmax.f32 %v35, %v36
    %v38 = vrot.slane %v37, 1
    %v39 = vmax.f32 %v37, %v38
    %v40 = vrsqrt.pop %v39
    %v41 = vmul.f32 %v39, %v40
    %vm42 = vcmp.eq.f32.partialorder %v39, inf
    %v43 = vsel %vm42, %v39, %v41
    %vm44 = vcmp.eq.f32.partialorder %v39, 0.0
    %v45 = vand.u32 %v39, 2147483648
    %v46 = vsel %vm44, %v45, %v43
    %s47 = sld [smem:[#allocation3]]
    %v48 = vstv %s47
    %v49 = vmul.f32 %v46, %v48
    %vm50 = vcmask 122880
    %51 = vst.msk [vmem:[#allocation7] sm:$0x1] %vm50, %v49
    // Predicated region
    $region10: #{tpu_custom_call.1} parent=1 // pred_check
      _
    $region11: #{tpu_custom_call.1} parent=1 // pred_check_branch
      %53 = sbr.rel (0) target = $region13
    $region12: #{tpu_custom_call.1} parent=1 // pred_region
      %s55 = ssub.s32 16, 16
      %56 = vsyncadd [#allocation6], %s55
      %s58 = sshll.u32 [#allocation7], 4
      %s59 = int_to_ptr.vmem [resolvable:$true] %s58
      %61 = dma.vmem_to_hbm [thread:$0]  %s59, 16, %s2, [#allocation6]
    $region13: #{tpu_custom_call.1} parent=1 // pred_fallthru
      _
    // Predicated region
    $region14: #{tpu_custom_call.1} parent=1 // pred_check
      _
    $region15: #{tpu_custom_call.1} parent=1 // pred_check_branch
      %63 = sbr.rel (0) target = $region17
    $region16: #{tpu_custom_call.1} parent=1 // pred_region
      %64 = dma.done [#allocation6], 16
    $region17: #{tpu_custom_call.1} parent=1 // pred_fallthru
      _
    %65 = vsyncpa [#allocation5], 1
    %66 = vsyncpa [#allocation6], 1

</llo_original>
